<compile_context>
chip_gen: v7x
topology: tpu7x:2x2x1
jax: 0.10.0
libtpu: 0.0.40
codegen_flags: <defaults>
</compile_context>

<pallas_src>
import functools

import jax
import jax.numpy as jnp
from jax import lax
from jax.experimental import pallas as pl
from jax.experimental.pallas import tpu as pltpu

N_DICT = 127                  # vocab-1 -> V = N_DICT + 1 = 128 (lane aligned)
V = N_DICT + 1                # embedding dim == vocab size (as in the module)
HIDDEN = 32                   # hidden_size
N_LAYERS = 1
BATCH = 8
TC_MAX = 128                  # max timesteps per grid step (VMEM-safe on v7x too)


def _lstm_chunk_kernel(tok_ref,                   # (Tc, B, 1) int32: this chunk's tokens
                       h0_ref, c0_ref,            # (B, H) f32 initial state
                       fused_ih_ref,              # (V, 4H) bf16  (= emb @ W_ih^T)
                       w_hh_ref,                  # (H, 4H) bf16
                       b_ref,                     # (1, 4H) f32  (= b_ih + b_hh)
                       w_dec_ref,                 # (H, V) bf16  (pre-scaled by 1/temp)
                       b_dec_ref,                 # (1, V) f32   (pre-scaled by 1/temp)
                       pred_ref,                  # (Tc, B, V) f32 out (per chunk)
                       h_out_ref, c_out_ref,      # (B, H) f32 out (final state)
                       gx_ref,                    # VMEM (Tc, B, 4H) f32 scratch
                       hhist_ref,                 # VMEM (Tc, B, H) f32 scratch
                       h_ref, c_ref,              # VMEM (B, H) f32 state carry
                       *, total_t):
    Tc, B, _ = tok_ref.shape
    H = h0_ref.shape[-1]
    Vv = fused_ih_ref.shape[0]
    chunk = pl.program_id(0)
    needs_mask = (total_t % Tc) != 0              # static python bool

    # Initialize the resident (h, c) carry on the first chunk.
    @pl.when(chunk == 0)
    def _():
        h_ref[...] = h0_ref[...]
        c_ref[...] = c0_ref[...]

    # ---------- Prologue (off the recurrence): batched input projection ------
    # one_hot(x) @ (emb @ W_ih^T) == emb[x] @ W_ih^T for all Tc steps at once.
    tok = tok_ref[...]                                               # (Tc, B, 1)
    iota_v = lax.broadcasted_iota(jnp.int32, (Tc, B, Vv), 2)
    onehot = (tok == iota_v).astype(jnp.bfloat16)                    # (Tc, B, V)
    gx = jnp.dot(onehot.reshape(Tc * B, Vv), fused_ih_ref[...],
                 preferred_element_type=jnp.float32)                 # (Tc*B, 4H)
    gx_ref[...] = (gx + b_ref[...]).reshape(Tc, B, 4 * H)            # bias added once

    # ---------- Serial recurrence: only h @ W_hh + precomputed gates ---------
    w_hh = w_hh_ref[...]

    def step(t, carry):
        h, c = carry
        gates = gx_ref[t] + jnp.dot(h.astype(jnp.bfloat16), w_hh,
                                    preferred_element_type=jnp.float32)  # (B, 4H)
        sig = jax.nn.sigmoid(gates)                  # one full-width EUP pass
        i_g = sig[:, 0 * H:1 * H]
        f_g = sig[:, 1 * H:2 * H]
        g_g = jnp.tanh(gates[:, 2 * H:3 * H])
        o_g = sig[:, 3 * H:4 * H]
        c_new = f_g * c + i_g * g_g
        h_new = o_g * jnp.tanh(c_new)
        hhist_ref[t] = h_new                          # history for batched decoder
        if needs_mask:                                # mask padded trailing steps
            valid = (chunk * Tc + t) < total_t
            h_new = jnp.where(valid, h_new, h)
            c_new = jnp.where(valid, c_new, c)
        return h_new, c_new

    h_fin, c_fin = lax.fori_loop(0, Tc, step, (h_ref[...], c_ref[...]))
    h_ref[...] = h_fin
    c_ref[...] = c_fin

    # ---------- Epilogue (off the recurrence): decoder + log-softmax ---------
    hh = hhist_ref[...].reshape(Tc * B, H).astype(jnp.bfloat16)
    logits = (jnp.dot(hh, w_dec_ref[...],
                      preferred_element_type=jnp.float32)
              + b_dec_ref[...])                                      # (Tc*B, V)
    m = jnp.max(logits, axis=-1, keepdims=True)
    shifted = logits - m
    lse = jnp.log(jnp.sum(jnp.exp(shifted), axis=-1, keepdims=True))
    pred_ref[...] = (shifted - lse).reshape(Tc, B, Vv)

    # Final state writeback to HBM only once, on the last chunk.
    @pl.when(chunk == pl.num_programs(0) - 1)
    def _():
        h_out_ref[...] = h_ref[...]
        c_out_ref[...] = c_ref[...]


def baseline_forward_seq(fused, tokens, hidden, temperature=1.0, chunk_size=None):
    """Teacher-forced multi-step forward: one pallas_call, grid over time chunks.

    tokens : (T, B) int32 token ids
    hidden : tuple (h, c), each (n_layers=1, B, H) float32
    returns (preds (T, B, V) log-probs, (h_new, c_new) each (1, B, H))
    """
    h0, c0 = hidden[0][0], hidden[1][0]                              # (B, H)
    T, B = tokens.shape
    H = h0.shape[-1]
    Vv = fused["fused_ih"].shape[0]

    Tc = int(chunk_size) if chunk_size is not None else min(T, TC_MAX)
    n_chunks = -(-T // Tc)
    T_pad = n_chunks * Tc

    tok = tokens.astype(jnp.int32)
    if T_pad != T:
        tok = jnp.pad(tok, ((0, T_pad - T), (0, 0)))                 # pad with id 0
    tok = tok[..., None]                                             # (T_pad, B, 1)

    # Fold 1/temperature into the decoder once per call (outside the kernel).
    inv_t = jnp.float32(1.0 / temperature)
    w_dec = (fused["w_dec_f32"] * inv_t).astype(jnp.bfloat16)        # (H, V)
    b_dec = (fused["b_dec"] * inv_t).astype(jnp.float32)             # (1, V)

    const2 = lambda c: (0, 0)
    kernel = functools.partial(_lstm_chunk_kernel, total_t=T)

    preds, h_out, c_out = pl.pallas_call(
        kernel,
        grid=(n_chunks,),
        in_specs=[
            pl.BlockSpec((Tc, B, 1), lambda c: (c, 0, 0)),           # tokens (per chunk)
            pl.BlockSpec((B, H), const2),                            # h0
            pl.BlockSpec((B, H), const2),                            # c0
            pl.BlockSpec((Vv, 4 * H), const2),                       # fused_ih (resident)
            pl.BlockSpec((H, 4 * H), const2),                        # w_hh (resident)
            pl.BlockSpec((1, 4 * H), const2),                        # b_gates
            pl.BlockSpec((H, Vv), const2),                           # w_dec (resident)
            pl.BlockSpec((1, Vv), const2),                           # b_dec
        ],
        out_specs=(
            pl.BlockSpec((Tc, B, Vv), lambda c: (c, 0, 0)),          # per-chunk log-probs
            pl.BlockSpec((B, H), const2),                            # final h
            pl.BlockSpec((B, H), const2),                            # final c
        ),
        out_shape=(
            jax.ShapeDtypeStruct((T_pad, B, Vv), jnp.float32),
            jax.ShapeDtypeStruct((B, H), jnp.float32),
            jax.ShapeDtypeStruct((B, H), jnp.float32),
        ),
        scratch_shapes=[
            pltpu.VMEM((Tc, B, 4 * H), jnp.float32),                 # precomputed gates
            pltpu.VMEM((Tc, B, H), jnp.float32),                     # h history
            pltpu.VMEM((B, H), jnp.float32),                         # h carry
            pltpu.VMEM((B, H), jnp.float32),                         # c carry
        ],
        compiler_params=pltpu.CompilerParams(
            dimension_semantics=("arbitrary",)),                     # sequential recurrence
    )(tok, h0, c0, fused["fused_ih"], fused["w_hh"], fused["b_gates"],
      w_dec, b_dec)

    if T_pad != T:
        preds = preds[:T]
    return preds, (h_out[None], c_out[None])


def baseline_forward(fused, x, hidden, temperature=1.0):
    """Pallas equivalent of Baseline.forward (single step == T=1 of the seq kernel)."""
    preds, hidden_new = baseline_forward_seq(fused, x[None, :], hidden, temperature)
    return preds[0], hidden_new


def init_params(key):
    ks = jax.random.split(key, 7)
    s = 0.1
    return {
        # nn.Embedding(N_DICT+1, N_DICT+1)
        "emb": s * jax.random.normal(ks[0], (V, V), jnp.float32),
        # nn.LSTM(V, HIDDEN): weights stored transposed (in, out)
        "w_ih_t": s * jax.random.normal(ks[1], (V, 4 * HIDDEN), jnp.float32),
        "w_hh_t": s * jax.random.normal(ks[2], (HIDDEN, 4 * HIDDEN), jnp.float32),
        "b_ih": s * jax.random.normal(ks[3], (1, 4 * HIDDEN), jnp.float32),
        "b_hh": s * jax.random.normal(ks[4], (1, 4 * HIDDEN), jnp.float32),
        # nn.Linear(HIDDEN, V): stored transposed (in, out)
        "w_dec_t": s * jax.random.normal(ks[5], (HIDDEN, V), jnp.float32),
        "b_dec": s * jax.random.normal(ks[6], (1, V), jnp.float32),
    }


def fuse_params(params):
    """One-time offline prep: fold embedding into W_ih, pre-add biases, bf16 weights.
    Temperature is folded per-call in the wrapper (it is a runtime argument)."""
    return {
        "fused_ih": (params["emb"] @ params["w_ih_t"]).astype(jnp.bfloat16),  # (V, 4H)
        "w_hh": params["w_hh_t"].astype(jnp.bfloat16),                        # (H, 4H)
        "b_gates": (params["b_ih"] + params["b_hh"]).astype(jnp.float32),     # (1, 4H)
        "w_dec_f32": params["w_dec_t"].astype(jnp.float32),                   # (H, V)
        "b_dec": params["b_dec"].astype(jnp.float32),                         # (1, V)
    }


def init_hidden(batch_size):
    return (jnp.zeros((N_LAYERS, batch_size, HIDDEN), jnp.float32),
            jnp.zeros((N_LAYERS, batch_size, HIDDEN), jnp.float32))


def _reference_forward(params, x, hidden, temperature=1.0):
    """Pure-JAX reference (mirrors PyTorch LSTM cell math, unfused f32)."""
    h, c = hidden[0][0], hidden[1][0]
    emb = params["emb"][x]
    gates = emb @ params["w_ih_t"] + h @ params["w_hh_t"] \
        + params["b_ih"] + params["b_hh"]
    H = HIDDEN
    i = jax.nn.sigmoid(gates[:, :H])
    f = jax.nn.sigmoid(gates[:, H:2 * H])
    g = jnp.tanh(gates[:, 2 * H:3 * H])
    o = jax.nn.sigmoid(gates[:, 3 * H:])
    c_new = f * c + i * g
    h_new = o * jnp.tanh(c_new)
    logits = (h_new @ params["w_dec_t"] + params["b_dec"]) / temperature
    pred = jax.nn.log_softmax(logits, axis=-1)
    return pred, (h_new[None], c_new[None])


def _reference_seq(params, toks, hidden, temperature=1.0):
    preds = []
    hid = hidden
    for t in range(toks.shape[0]):
        p, hid = _reference_forward(params, toks[t], hid, temperature)
        preds.append(p)
    return jnp.stack(preds, axis=0), hid


if __name__ == "__main__":
    key = jax.random.PRNGKey(0)
    pkey, xkey, skey, skey2 = jax.random.split(key, 4)

    params = init_params(pkey)
    fused = fuse_params(params)          # offline: embedding folded into W_ih, bf16 weights

    # ---- single-step forward (module semantics) ----
    x = jax.random.randint(xkey, (BATCH,), 0, V, dtype=jnp.int32)
    hidden = init_hidden(BATCH)
    pred, (h_new, c_new) = baseline_forward(fused, x, hidden, temperature=0.8)
    jax.block_until_ready((pred, h_new, c_new))

    ref_pred, (ref_h, ref_c) = _reference_forward(params, x, hidden, 0.8)
    assert pred.shape == (BATCH, V) and h_new.shape == (1, BATCH, HIDDEN)
    assert jnp.allclose(pred, ref_pred, atol=2e-2, rtol=2e-2)
    assert jnp.allclose(h_new, ref_h, atol=2e-2, rtol=2e-2)
    assert jnp.allclose(c_new, ref_c, atol=2e-2, rtol=2e-2)

    # ---- multi-step (teacher-forced) forward: single chunk ----
    T = 6
    toks = jax.random.randint(skey, (T, BATCH), 0, V, dtype=jnp.int32)
    preds, (h_seq, c_seq) = baseline_forward_seq(fused, toks, init_hidden(BATCH), 0.8)
    jax.block_until_ready((preds, h_seq, c_seq))

    ref_preds, (rh, rc) = _reference_seq(params, toks, init_hidden(BATCH), 0.8)
    assert preds.shape == (T, BATCH, V)
    assert jnp.allclose(preds, ref_preds, atol=2e-2, rtol=2e-2)
    assert jnp.allclose(h_seq, rh, atol=2e-2, rtol=2e-2)
    assert jnp.allclose(c_seq, rc, atol=2e-2, rtol=2e-2)

    # ---- multi-step with explicit chunking + tail padding/masking ----
    T2 = 11
    toks2 = jax.random.randint(skey2, (T2, BATCH), 0, V, dtype=jnp.int32)
    preds2, (h2, c2) = baseline_forward_seq(fused, toks2, init_hidden(BATCH), 1.3,
                                            chunk_size=4)   # 3 chunks, 1 padded step
    jax.block_until_ready((preds2, h2, c2))

    ref_preds2, (rh2, rc2) = _reference_seq(params, toks2, init_hidden(BATCH), 1.3)
    assert preds2.shape == (T2, BATCH, V)
    assert jnp.allclose(preds2, ref_preds2, atol=2e-2, rtol=2e-2)
    assert jnp.allclose(h2, rh2, atol=2e-2, rtol=2e-2)
    assert jnp.allclose(c2, rc2, atol=2e-2, rtol=2e-2)

    print("KERNEL_OK")
</pallas_src>

<mosaic_0001>
module attributes {stable_mosaic.version = 11 : i64} {
  func.func @_lstm_chunk_kernel(%arg0: i32, %arg1: memref<1x8x1xi32, #tpu.memory_space<vmem>>, %arg2: memref<8x32xf32, #tpu.memory_space<vmem>>, %arg3: memref<8x32xf32, #tpu.memory_space<vmem>>, %arg4: memref<128x128xbf16, #tpu.memory_space<vmem>>, %arg5: memref<32x128xbf16, #tpu.memory_space<vmem>>, %arg6: memref<1x128xf32, #tpu.memory_space<vmem>>, %arg7: memref<32x128xbf16, #tpu.memory_space<vmem>>, %arg8: memref<1x128xf32, #tpu.memory_space<vmem>>, %arg9: memref<1x8x128xf32, #tpu.memory_space<vmem>>, %arg10: memref<8x32xf32, #tpu.memory_space<vmem>>, %arg11: memref<8x32xf32, #tpu.memory_space<vmem>>, %arg12: memref<1x8x128xf32, #tpu.memory_space<vmem>>, %arg13: memref<1x8x32xf32, #tpu.memory_space<vmem>>, %arg14: memref<8x32xf32, #tpu.memory_space<vmem>>, %arg15: memref<8x32xf32, #tpu.memory_space<vmem>>) attributes {dimension_semantics = [#tpu.dimension_semantics<arbitrary>], iteration_bounds = array<i64: 1>, scalar_prefetch = 0 : i64, scratch_operands = 4 : i64, tpu.core_type = #tpu.core_type<tc>, window_params = [{transform_indices = @transform_0, window_bounds = array<i64: 1, 8, 1>}, {pipeline_mode = #tpu.pipeline_mode<synchronous>, transform_indices = @transform_1, window_bounds = array<i64: 8, 32>}, {pipeline_mode = #tpu.pipeline_mode<synchronous>, transform_indices = @transform_2, window_bounds = array<i64: 8, 32>}, {pipeline_mode = #tpu.pipeline_mode<synchronous>, transform_indices = @transform_3, window_bounds = array<i64: 128, 128>}, {pipeline_mode = #tpu.pipeline_mode<synchronous>, transform_indices = @transform_4, window_bounds = array<i64: 32, 128>}, {pipeline_mode = #tpu.pipeline_mode<synchronous>, transform_indices = @transform_5, window_bounds = array<i64: 1, 128>}, {pipeline_mode = #tpu.pipeline_mode<synchronous>, transform_indices = @transform_6, window_bounds = array<i64: 32, 128>}, {pipeline_mode = #tpu.pipeline_mode<synchronous>, transform_indices = @transform_7, window_bounds = array<i64: 1, 128>}, {transform_indices = @transform_8, window_bounds = array<i64: 1, 8, 128>}, {pipeline_mode = #tpu.pipeline_mode<synchronous>, transform_indices = @transform_9, window_bounds = array<i64: 8, 32>}, {pipeline_mode = #tpu.pipeline_mode<synchronous>, transform_indices = @transform_10, window_bounds = array<i64: 8, 32>}]} {
    %c0_i32 = arith.constant 0 : i32
    %0 = arith.cmpi eq, %arg0, %c0_i32 : i32
    %1 = arith.extui %0 : i1 to i32
    %c0_i32_0 = arith.constant 0 : i32
    %2 = arith.cmpi ne, %1, %c0_i32_0 : i32
    scf.if %2 {
      %c0_42 = arith.constant 0 : index
      %c0_43 = arith.constant 0 : index
      %71 = vector.load %arg2[%c0_42, %c0_43] : memref<8x32xf32, #tpu.memory_space<vmem>>, vector<8x32xf32>
      %c0_44 = arith.constant 0 : index
      %c0_45 = arith.constant 0 : index
      %72 = vector.load %arg14[%c0_44, %c0_45] : memref<8x32xf32, #tpu.memory_space<vmem>>, vector<8x32xf32>
      tpu.vector_store %arg14[%c0_44, %c0_45], %71 {strides = array<i32>} : memref<8x32xf32, #tpu.memory_space<vmem>>, vector<8x32xf32>,
      %c0_46 = arith.constant 0 : index
      %c0_47 = arith.constant 0 : index
      %73 = vector.load %arg3[%c0_46, %c0_47] : memref<8x32xf32, #tpu.memory_space<vmem>>, vector<8x32xf32>
      %c0_48 = arith.constant 0 : index
      %c0_49 = arith.constant 0 : index
      %74 = vector.load %arg15[%c0_48, %c0_49] : memref<8x32xf32, #tpu.memory_space<vmem>>, vector<8x32xf32>
      tpu.vector_store %arg15[%c0_48, %c0_49], %73 {strides = array<i32>} : memref<8x32xf32, #tpu.memory_space<vmem>>, vector<8x32xf32>,
    } else {
    }
    %c0 = arith.constant 0 : index
    %c0_1 = arith.constant 0 : index
    %c0_2 = arith.constant 0 : index
    %3 = vector.load %arg1[%c0, %c0_1, %c0_2] : memref<1x8x1xi32, #tpu.memory_space<vmem>>, vector<1x8x1xi32>
    %4 = tpu.iota {dimensions = array<i32: 2>} : vector<1x8x128xi32>
    %5 = vector.broadcast %3 : vector<1x8x1xi32> to vector<1x8x128xi32>
    %6 = arith.cmpi eq, %5, %4 : vector<1x8x128xi32>
    %7 = arith.extui %6 : vector<1x8x128xi1> to vector<1x8x128xi32>
    %8 = arith.sitofp %7 : vector<1x8x128xi32> to vector<1x8x128xf32>
    %9 = arith.truncf %8 : vector<1x8x128xf32> to vector<1x8x128xbf16>
    %10 = vector.shape_cast %9 : vector<1x8x128xbf16> to vector<8x128xbf16>
    %c0_3 = arith.constant 0 : index
    %c0_4 = arith.constant 0 : index
    %11 = vector.load %arg4[%c0_3, %c0_4] : memref<128x128xbf16, #tpu.memory_space<vmem>>, vector<128x128xbf16>
    %cst = arith.constant dense<0.000000e+00> : vector<8x128xf32>
    %12 = tpu.matmul %10, %11, %cst {dimension_numbers = #tpu.dot_dimension_numbers<[1], [0], [0], [1], [0, 0, 1, 1], [], []>} : vector<8x128xbf16>, vector<128x128xbf16>, vector<8x128xf32> -> vector<8x128xf32>
    %c0_5 = arith.constant 0 : index
    %c0_6 = arith.constant 0 : index
    %13 = vector.load %arg6[%c0_5, %c0_6] : memref<1x128xf32, #tpu.memory_space<vmem>>, vector<1x128xf32>
    %14 = vector.broadcast %13 : vector<1x128xf32> to vector<8x128xf32>
    %15 = arith.addf %12, %14 : vector<8x128xf32>
    %16 = vector.shape_cast %15 : vector<8x128xf32> to vector<1x8x128xf32>
    %c0_7 = arith.constant 0 : index
    %c0_8 = arith.constant 0 : index
    %c0_9 = arith.constant 0 : index
    %17 = vector.load %arg12[%c0_7, %c0_8, %c0_9] : memref<1x8x128xf32, #tpu.memory_space<vmem>>, vector<1x8x128xf32>
    tpu.vector_store %arg12[%c0_7, %c0_8, %c0_9], %16 {strides = array<i32>} : memref<1x8x128xf32, #tpu.memory_space<vmem>>, vector<1x8x128xf32>,
    %c0_10 = arith.constant 0 : index
    %c0_11 = arith.constant 0 : index
    %18 = vector.load %arg5[%c0_10, %c0_11] : memref<32x128xbf16, #tpu.memory_space<vmem>>, vector<32x128xbf16>
    %c0_12 = arith.constant 0 : index
    %c0_13 = arith.constant 0 : index
    %19 = vector.load %arg14[%c0_12, %c0_13] : memref<8x32xf32, #tpu.memory_space<vmem>>, vector<8x32xf32>
    %c0_14 = arith.constant 0 : index
    %c0_15 = arith.constant 0 : index
    %20 = vector.load %arg15[%c0_14, %c0_15] : memref<8x32xf32, #tpu.memory_space<vmem>>, vector<8x32xf32>
    %c0_i32_16 = arith.constant 0 : i32
    %21 = arith.index_cast %c0_i32_16 : i32 to index
    %c0_17 = arith.constant 0 : index
    %c0_18 = arith.constant 0 : index
    %22 = vector.load %arg12[%21, %c0_17, %c0_18] : memref<1x8x128xf32, #tpu.memory_space<vmem>>, vector<1x8x128xf32>
    %23 = vector.shape_cast %22 : vector<1x8x128xf32> to vector<8x128xf32>
    %24 = arith.truncf %19 : vector<8x32xf32> to vector<8x32xbf16>
    %cst_19 = arith.constant dense<0.000000e+00> : vector<8x128xf32>
    %25 = tpu.matmul %24, %18, %cst_19 {dimension_numbers = #tpu.dot_dimension_numbers<[1], [0], [0], [1], [0, 0, 1, 1], [], []>} : vector<8x32xbf16>, vector<32x128xbf16>, vector<8x128xf32> -> vector<8x128xf32>
    %26 = arith.addf %23, %25 : vector<8x128xf32>
    %27 = arith.negf %26 : vector<8x128xf32>
    %28 = math.exp %27 : vector<8x128xf32>
    %cst_20 = arith.constant 1.000000e+00 : f32
    %29 = vector.broadcast %cst_20 : f32 to vector<8x128xf32>
    %30 = arith.addf %29, %28 : vector<8x128xf32>
    %31 = arith.divf %29, %30 : vector<8x128xf32>
    %32 = vector.extract_strided_slice %31 {offsets = [0, 0], sizes = [8, 32], strides = [1, 1]} : vector<8x128xf32> to vector<8x32xf32>
    %33 = vector.extract_strided_slice %31 {offsets = [0, 32], sizes = [8, 32], strides = [1, 1]} : vector<8x128xf32> to vector<8x32xf32>
    %34 = vector.extract_strided_slice %26 {offsets = [0, 64], sizes = [8, 32], strides = [1, 1]} : vector<8x128xf32> to vector<8x32xf32>
    %35 = math.tanh %34 : vector<8x32xf32>
    %36 = vector.extract_strided_slice %31 {offsets = [0, 96], sizes = [8, 32], strides = [1, 1]} : vector<8x128xf32> to vector<8x32xf32>
    %37 = arith.mulf %33, %20 : vector<8x32xf32>
    %38 = arith.mulf %32, %35 : vector<8x32xf32>
    %39 = arith.addf %37, %38 : vector<8x32xf32>
    %40 = math.tanh %39 : vector<8x32xf32>
    %41 = arith.mulf %36, %40 : vector<8x32xf32>
    %42 = arith.index_cast %c0_i32_16 : i32 to index
    %c0_21 = arith.constant 0 : index
    %c0_22 = arith.constant 0 : index
    %43 = vector.load %arg13[%42, %c0_21, %c0_22] : memref<1x8x32xf32, #tpu.memory_space<vmem>>, vector<1x8x32xf32>
    %44 = vector.shape_cast %43 : vector<1x8x32xf32> to vector<8x32xf32>
    %45 = vector.shape_cast %41 : vector<8x32xf32> to vector<1x8x32xf32>
    tpu.vector_store %arg13[%42, %c0_21, %c0_22], %45 {strides = array<i32>} : memref<1x8x32xf32, #tpu.memory_space<vmem>>, vector<1x8x32xf32>,
    %c1_i32 = arith.constant 1 : i32
    %c0_23 = arith.constant 0 : index
    %c0_24 = arith.constant 0 : index
    %46 = vector.load %arg14[%c0_23, %c0_24] : memref<8x32xf32, #tpu.memory_space<vmem>>, vector<8x32xf32>
    tpu.vector_store %arg14[%c0_23, %c0_24], %41 {strides = array<i32>} : memref<8x32xf32, #tpu.memory_space<vmem>>, vector<8x32xf32>,
    %c0_25 = arith.constant 0 : index
    %c0_26 = arith.constant 0 : index
    %47 = vector.load %arg15[%c0_25, %c0_26] : memref<8x32xf32, #tpu.memory_space<vmem>>, vector<8x32xf32>
    tpu.vector_store %arg15[%c0_25, %c0_26], %39 {strides = array<i32>} : memref<8x32xf32, #tpu.memory_space<vmem>>, vector<8x32xf32>,
    %c0_27 = arith.constant 0 : index
    %c0_28 = arith.constant 0 : index
    %c0_29 = arith.constant 0 : index
    %48 = vector.load %arg13[%c0_27, %c0_28, %c0_29] : memref<1x8x32xf32, #tpu.memory_space<vmem>>, vector<1x8x32xf32>
    %49 = vector.shape_cast %48 : vector<1x8x32xf32> to vector<8x32xf32>
    %50 = arith.truncf %49 : vector<8x32xf32> to vector<8x32xbf16>
    %c0_30 = arith.constant 0 : index
    %c0_31 = arith.constant 0 : index
    %51 = vector.load %arg7[%c0_30, %c0_31] : memref<32x128xbf16, #tpu.memory_space<vmem>>, vector<32x128xbf16>
    %cst_32 = arith.constant dense<0.000000e+00> : vector<8x128xf32>
    %52 = tpu.matmul %50, %51, %cst_32 {dimension_numbers = #tpu.dot_dimension_numbers<[1], [0], [0], [1], [0, 0, 1, 1], [], []>} : vector<8x32xbf16>, vector<32x128xbf16>, vector<8x128xf32> -> vector<8x128xf32>
    %c0_33 = arith.constant 0 : index
    %c0_34 = arith.constant 0 : index
    %53 = vector.load %arg8[%c0_33, %c0_34] : memref<1x128xf32, #tpu.memory_space<vmem>>, vector<1x128xf32>
    %54 = vector.broadcast %53 : vector<1x128xf32> to vector<8x128xf32>
    %55 = arith.addf %52, %54 : vector<8x128xf32>
    %cst_35 = arith.constant dense<0xFF800000> : vector<8xf32>
    %56 = vector.multi_reduction <maximumf>, %55, %cst_35 [1] : vector<8x128xf32> to vector<8xf32>
    %57 = vector.shape_cast %56 : vector<8xf32> to vector<8x1xf32>
    %58 = vector.broadcast %57 : vector<8x1xf32> to vector<8x128xf32>
    %59 = arith.subf %55, %58 : vector<8x128xf32>
    %60 = math.exp %59 : vector<8x128xf32>
    %cst_36 = arith.constant dense<0.000000e+00> : vector<8xf32>
    %61 = vector.multi_reduction <add>, %60, %cst_36 [1] : vector<8x128xf32> to vector<8xf32>
    %62 = vector.shape_cast %61 : vector<8xf32> to vector<8x1xf32>
    %63 = math.log %62 : vector<8x1xf32>
    %64 = vector.broadcast %63 : vector<8x1xf32> to vector<8x128xf32>
    %65 = arith.subf %59, %64 : vector<8x128xf32>
    %66 = vector.shape_cast %65 : vector<8x128xf32> to vector<1x8x128xf32>
    %c0_37 = arith.constant 0 : index
    %c0_38 = arith.constant 0 : index
    %c0_39 = arith.constant 0 : index
    %67 = vector.load %arg9[%c0_37, %c0_38, %c0_39] : memref<1x8x128xf32, #tpu.memory_space<vmem>>, vector<1x8x128xf32>
    tpu.vector_store %arg9[%c0_37, %c0_38, %c0_39], %66 {strides = array<i32>} : memref<1x8x128xf32, #tpu.memory_space<vmem>>, vector<1x8x128xf32>,
    %c0_i32_40 = arith.constant 0 : i32
    %68 = arith.cmpi eq, %arg0, %c0_i32_40 : i32
    %69 = arith.extui %68 : i1 to i32
    %c0_i32_41 = arith.constant 0 : i32
    %70 = arith.cmpi ne, %69, %c0_i32_41 : i32
    scf.if %70 {
      %c0_42 = arith.constant 0 : index
      %c0_43 = arith.constant 0 : index
      %71 = vector.load %arg14[%c0_42, %c0_43] : memref<8x32xf32, #tpu.memory_space<vmem>>, vector<8x32xf32>
      %c0_44 = arith.constant 0 : index
      %c0_45 = arith.constant 0 : index
      %72 = vector.load %arg10[%c0_44, %c0_45] : memref<8x32xf32, #tpu.memory_space<vmem>>, vector<8x32xf32>
      tpu.vector_store %arg10[%c0_44, %c0_45], %71 {strides = array<i32>} : memref<8x32xf32, #tpu.memory_space<vmem>>, vector<8x32xf32>,
      %c0_46 = arith.constant 0 : index
      %c0_47 = arith.constant 0 : index
      %73 = vector.load %arg15[%c0_46, %c0_47] : memref<8x32xf32, #tpu.memory_space<vmem>>, vector<8x32xf32>
      %c0_48 = arith.constant 0 : index
      %c0_49 = arith.constant 0 : index
      %74 = vector.load %arg11[%c0_48, %c0_49] : memref<8x32xf32, #tpu.memory_space<vmem>>, vector<8x32xf32>
      tpu.vector_store %arg11[%c0_48, %c0_49], %73 {strides = array<i32>} : memref<8x32xf32, #tpu.memory_space<vmem>>, vector<8x32xf32>,
    } else {
    }
    return
  }
  func.func @transform_0(%arg0: i32) -> (i32, i32, i32) {
    %c0_i32 = arith.constant 0 : i32
    %c0_i32_0 = arith.constant 0 : i32
    %c0_i32_1 = arith.constant 0 : i32
    return %arg0, %c0_i32, %c0_i32_0 : i32, i32, i32
  }
  func.func @transform_1(%arg0: i32) -> (i32, i32) {
    %c0_i32 = arith.constant 0 : i32
    %c0_i32_0 = arith.constant 0 : i32
    %c0_i32_1 = arith.constant 0 : i32
    return %c0_i32, %c0_i32_0 : i32, i32
  }
  func.func @transform_2(%arg0: i32) -> (i32, i32) {
    %c0_i32 = arith.constant 0 : i32
    %c0_i32_0 = arith.constant 0 : i32
    %c0_i32_1 = arith.constant 0 : i32
    return %c0_i32, %c0_i32_0 : i32, i32
  }
  func.func @transform_3(%arg0: i32) -> (i32, i32) {
    %c0_i32 = arith.constant 0 : i32
    %c0_i32_0 = arith.constant 0 : i32
    %c0_i32_1 = arith.constant 0 : i32
    return %c0_i32, %c0_i32_0 : i32, i32
  }
  func.func @transform_4(%arg0: i32) -> (i32, i32) {
    %c0_i32 = arith.constant 0 : i32
    %c0_i32_0 = arith.constant 0 : i32
    %c0_i32_1 = arith.constant 0 : i32
    return %c0_i32, %c0_i32_0 : i32, i32
  }
  func.func @transform_5(%arg0: i32) -> (i32, i32) {
    %c0_i32 = arith.constant 0 : i32
    %c0_i32_0 = arith.constant 0 : i32
    %c0_i32_1 = arith.constant 0 : i32
    return %c0_i32, %c0_i32_0 : i32, i32
  }
  func.func @transform_6(%arg0: i32) -> (i32, i32) {
    %c0_i32 = arith.constant 0 : i32
    %c0_i32_0 = arith.constant 0 : i32
    %c0_i32_1 = arith.constant 0 : i32
    return %c0_i32, %c0_i32_0 : i32, i32
  }
  func.func @transform_7(%arg0: i32) -> (i32, i32) {
    %c0_i32 = arith.constant 0 : i32
    %c0_i32_0 = arith.constant 0 : i32
    %c0_i32_1 = arith.constant 0 : i32
    return %c0_i32, %c0_i32_0 : i32, i32
  }
  func.func @transform_8(%arg0: i32) -> (i32, i32, i32) {
    %c0_i32 = arith.constant 0 : i32
    %c0_i32_0 = arith.constant 0 : i32
    %c0_i32_1 = arith.constant 0 : i32
    return %arg0, %c0_i32, %c0_i32_0 : i32, i32, i32
  }
  func.func @transform_9(%arg0: i32) -> (i32, i32) {
    %c0_i32 = arith.constant 0 : i32
    %c0_i32_0 = arith.constant 0 : i32
    %c0_i32_1 = arith.constant 0 : i32
    return %c0_i32, %c0_i32_0 : i32, i32
  }
  func.func @transform_10(%arg0: i32) -> (i32, i32) {
    %c0_i32 = arith.constant 0 : i32
    %c0_i32_0 = arith.constant 0 : i32
    %c0_i32_1 = arith.constant 0 : i32
    return %c0_i32, %c0_i32_0 : i32, i32
  }
}

</mosaic_0001>

<llo_original>
// kernel: tpu_custom_call.1
$region0: #{tpu_custom_call.1}
  #allocation0 [shape = 'u32[]', space=smem, size = 0x4, offset = 0x4, fixed_abs, tag = 'smem constant byte address 0x4 - core index']
  #allocation1 [shape = 'u32[144,128]{1,0:T(1,128)}', space=vmem, size = 0x12000, scoped, tag = 'internal scratch']
  #allocation2 [shape = 'f32[1,8,128]{2,1,0:T(8,128)}', space=vmem, size = 0x1000, scoped, tag = 'scratch operand']
  #allocation3 [shape = 'f32[1,8,32]{2,1,0:T(8,128)}', space=vmem, size = 0x1000, scoped, tag = 'scratch operand']
  #allocation4 [shape = 'f32[8,32]{1,0:T(8,128)}', space=vmem, size = 0x1000, scoped, tag = 'scratch operand']
  #allocation5 [shape = 'f32[8,32]{1,0:T(8,128)}', space=vmem, size = 0x1000, scoped, tag = 'scratch operand']
  %s0 = inlined_call_operand.vmem [shape: s32[1,8,1], index: 0, kind: input, shape index: {}]
  %s1 = inlined_call_operand.vmem [shape: f32[8,32], index: 1, kind: input, shape index: {}]
  %s2 = inlined_call_operand.hbm [shape: f32[8,32], index: 2, kind: input, shape index: {}]
  %s3 = inlined_call_operand.hbm [shape: bf16[128,128], index: 3, kind: input, shape index: {}]
  %s4 = inlined_call_operand.vmem [shape: bf16[32,128], index: 4, kind: input, shape index: {}]
  %s5 = inlined_call_operand.vmem [shape: f32[1,128], index: 5, kind: input, shape index: {}]
  %s6 = inlined_call_operand.hbm [shape: bf16[32,128], index: 6, kind: input, shape index: {}]
  %s7 = inlined_call_operand.vmem [shape: f32[1,128], index: 7, kind: input, shape index: {}]
  %s8 = inlined_call_operand.hbm [shape: f32[1,8,128], index: 8, kind: output, shape index: {0}]
  %s9 = inlined_call_operand.hbm [shape: f32[8,32], index: 9, kind: output, shape index: {1}]
  %s10 = inlined_call_operand.hbm [shape: f32[8,32], index: 10, kind: output, shape index: {2}]
  %11 = xla_tuple %s8, %s9, %s10
  %s12 = sld [smem:[#allocation0]]
  $region78: #{tpu_custom_call.1} parent=0
    _
  %s14 = ssub.s32 1, %s12
  %s15 = scalar_select 0, %s14, %s12
  $region1: #{tpu_custom_call.1} parent=0
    #allocation6 [shape = 'u8[4096]{0}', space=vmem, size = 0x1000, scoped, tag = 'input window, operand 2, single buffered']
    #allocation7 [shape = 's32[1]{0}', space=sflag, size = 0x4, scoped, tag = 'scoped memory for tpu_custom_call.1']
    #allocation8 [shape = 's32[1]{0}', space=sflag, size = 0x4, scoped, tag = 'scoped memory for tpu_custom_call.1']
    #allocation9 [shape = 'u8[32768]{0}', space=vmem, size = 0x8000, scoped, tag = 'input window, operand 3, single buffered']
    #allocation10 [shape = 's32[1]{0}', space=sflag, size = 0x4, scoped, tag = 'scoped memory for tpu_custom_call.1']
    #allocation11 [shape = 'u8[8192]{0}', space=vmem, size = 0x2000, scoped, tag = 'input window, operand 6, single buffered']
    #allocation12 [shape = 'u8[4096]{0}', space=vmem, size = 0x1000, scoped, tag = 'output window, operand 0, single buffered']
    #allocation13 [shape = 'u8[4096]{0}', space=vmem, size = 0x1000, scoped, tag = 'output window, operand 1, single buffered']
    #allocation14 [shape = 's32[1]{0}', space=sflag, size = 0x4, scoped, tag = 'scoped memory for tpu_custom_call.1']
    #allocation15 [shape = 'u8[4096]{0}', space=vmem, size = 0x1000, scoped, tag = 'output window, operand 2, single buffered']
    %16 = vsyncpa [#allocation7], 0
    %17 = vsyncpa [#allocation10], 0
    %18 = vsyncpa [#allocation8], 0
    %19 = vsyncpa [#allocation14], 0
    // Predicated region
    $region2: #{tpu_custom_call.1} parent=1 // pred_check
      _
    $region3: #{tpu_custom_call.1} parent=1 // pred_check_branch
      %21 = sbr.rel (0) target = $region5
    $region4: #{tpu_custom_call.1} parent=1 // pred_region
      _
    $region5: #{tpu_custom_call.1} parent=1 // pred_fallthru
      _
    // Predicated region
    $region6: #{tpu_custom_call.1} parent=1 // pred_check
      _
    $region7: #{tpu_custom_call.1} parent=1 // pred_check_branch
      %23 = sbr.rel (0) target = $region9
    $region8: #{tpu_custom_call.1} parent=1 // pred_region
      _
    $region9: #{tpu_custom_call.1} parent=1 // pred_fallthru
      _
    // Predicated region
    $region10: #{tpu_custom_call.1} parent=1 // pred_check
      _
    $region11: #{tpu_custom_call.1} parent=1 // pred_check_branch
      %25 = sbr.rel (0) target = $region13
    $region12: #{tpu_custom_call.1} parent=1 // pred_region
      %s27 = ssub.s32 128, 128
      %28 = vsyncadd [#allocation7], %s27
      %s30 = sshll.u32 [#allocation6], 4
      %s31 = int_to_ptr.vmem [resolvable:$true] %s30
      %33 = dma.hbm_to_vmem [thread:$0]  %s2, 128, %s31, [#allocation7]
    $region13: #{tpu_custom_call.1} parent=1 // pred_fallthru
      _
    // Predicated region
    $region14: #{tpu_custom_call.1} parent=1 // pred_check
      _
    $region15: #{tpu_custom_call.1} parent=1 // pred_check_branch
      %35 = sbr.rel (0) target = $region17
    $region16: #{tpu_custom_call.1} parent=1 // pred_region
      %s37 = ssub.s32 1024, 1024
      %38 = vsyncadd [#allocation10], %s37
      %s39 = sshll.u32 [#allocation9], 4
      %s40 = int_to_ptr.vmem [resolvable:$true] %s39
      %45 = dma.hbm_to_vmem [thread:$0]  %s3, 1024, %s40, [#allocation10], 64, 64, 4
    $region17: #{tpu_custom_call.1} parent=1 // pred_fallthru
      _
    // Predicated region
    $region18: #{tpu_custom_call.1} parent=1 // pred_check
      _
    $region19: #{tpu_custom_call.1} parent=1 // pred_check_branch
      %47 = sbr.rel (0) target = $region21
    $region20: #{tpu_custom_call.1} parent=1 // pred_region
      _
    $region21: #{tpu_custom_call.1} parent=1 // pred_fallthru
      _
    // Predicated region
    $region22: #{tpu_custom_call.1} parent=1 // pred_check
      _
    $region23: #{tpu_custom_call.1} parent=1 // pred_check_branch
      %49 = sbr.rel (0) target = $region25
    $region24: #{tpu_custom_call.1} parent=1 // pred_region
      _
    $region25: #{tpu_custom_call.1} parent=1 // pred_fallthru
      _
    // Predicated region
    $region26: #{tpu_custom_call.1} parent=1 // pred_check
      _
    $region27: #{tpu_custom_call.1} parent=1 // pred_check_branch
      %51 = sbr.rel (0) target = $region29
    $region28: #{tpu_custom_call.1} parent=1 // pred_region
      %s53 = ssub.s32 256, 256
      %54 = vsyncadd [#allocation10], %s53
      %s55 = sshll.u32 [#allocation11], 4
      %s56 = int_to_ptr.vmem [resolvable:$true] %s55
      %61 = dma.hbm_to_vmem [thread:$0]  %s6, 256, %s56, [#allocation10], 64, 64, 4
    $region29: #{tpu_custom_call.1} parent=1 // pred_fallthru
      _
    // Predicated region
    $region30: #{tpu_custom_call.1} parent=1 // pred_check
      _
    $region31: #{tpu_custom_call.1} parent=1 // pred_check_branch
      %63 = sbr.rel (0) target = $region33
    $region32: #{tpu_custom_call.1} parent=1 // pred_region
      _
    $region33: #{tpu_custom_call.1} parent=1 // pred_fallthru
      _
    // Predicated region
    $region34: #{tpu_custom_call.1} parent=1 // pred_check
      _
    $region35: #{tpu_custom_call.1} parent=1 // pred_check_branch
      %65 = sbr.rel (0) target = $region37
    $region36: #{tpu_custom_call.1} parent=1 // pred_region
      %66 = dma.done [#allocation7], 128
    $region37: #{tpu_custom_call.1} parent=1 // pred_fallthru
      _
    // Predicated region
    $region38: #{tpu_custom_call.1} parent=1 // pred_check
      _
    $region39: #{tpu_custom_call.1} parent=1 // pred_check_branch
      %68 = sbr.rel (0) target = $region41
    $region40: #{tpu_custom_call.1} parent=1 // pred_region
      %69 = dma.done [#allocation10], 1024
    $region41: #{tpu_custom_call.1} parent=1 // pred_fallthru
      _
    // Predicated region
    $region42: #{tpu_custom_call.1} parent=1 // pred_check
      _
    $region43: #{tpu_custom_call.1} parent=1 // pred_check_branch
      %71 = sbr.rel (0) target = $region45
    $region44: #{tpu_custom_call.1} parent=1 // pred_region
      %72 = dma.done [#allocation10], 256
    $region45: #{tpu_custom_call.1} parent=1 // pred_fallthru
      _
    %p74 = scmp.eq.s32.totalorder 0, 0
    // Predicated region
    $region46: #{tpu_custom_call.1} parent=1 // pred_check
      %p75 = pneg %p74
    $region47: #{tpu_custom_call.1} parent=1 // pred_check_branch
      %77 = sbr.rel (%p75) target = $region49
    $region48: #{tpu_custom_call.1} parent=1 // pred_region
      %v78 = vld [vmem:[%s1] sm:$0xff]
      %vm79 = vcmask 261120
      %80 = vst.msk [vmem:[#allocation4] sm:$0xff] %vm79, %v78
      %v81 = vld [vmem:[#allocation6] sm:$0xff]
      %82 = vst.msk [vmem:[#allocation5] sm:$0xff] %vm79, %v81
    $region49: #{tpu_custom_call.1} parent=1 // pred_fallthru
      _
    %v83 = vld [vmem:[%s0] sm:$0xff]
    %v84 = vlaneseq
    %v85 = vand.u32 %v84, 127
    %86 = vset.pattern.permute.xlu0 0
    %87 = vperm.xlu0 %86, %v83
    %v88 = vpop.permute.xlu0 %87
    %vm89 = vcmp.eq.s32.totalorder %v88, %v85
    %v90 = vsel %vm89, 1, 0
    %v91 = vcvt.s32.f32 %v90
    %v92 = vpack.c.bf16 %v91, %v91
    %v93 = vld [vmem:[#allocation9] sm:$0xf]
    %v94 = vld [vmem:[#allocation9 + $0x4] sm:$0xf]
    %v95 = vld [vmem:[#allocation9 + $0x8] sm:$0xf]
    %v96 = vld [vmem:[#allocation9 + $0xc] sm:$0xf]
    %v97 = vld [vmem:[#allocation9 + $0x10] sm:$0xf]
    %v98 = vld [vmem:[#allocation9 + $0x14] sm:$0xf]
    %v99 = vld [vmem:[#allocation9 + $0x18] sm:$0xf]
    %v100 = vld [vmem:[#allocation9 + $0x1c] sm:$0xf]
    %v101 = vld [vmem:[#allocation9 + $0x20] sm:$0xf]
    %v102 = vld [vmem:[#allocation9 + $0x24] sm:$0xf]
    %v103 = vld [vmem:[#allocation9 + $0x28] sm:$0xf]
    %v104 = vld [vmem:[#allocation9 + $0x2c] sm:$0xf]
    %v105 = vld [vmem:[#allocation9 + $0x30] sm:$0xf]
    %v106 = vld [vmem:[#allocation9 + $0x34] sm:$0xf]
    %v107 = vld [vmem:[#allocation9 + $0x38] sm:$0xf]
    %v108 = vld [vmem:[#allocation9 + $0x3c] sm:$0xf]
    %v109 = vld [vmem:[%s5] sm:$0x1]
    %v111 = vlaneseq
    %v112 = vshrl.u32 %v111, 7
    %v113 = vsub.s32 0, %v112
    %v114 = vrot.slane %v109, %v113
    %v132 = vunpack.c.l.b16 %v93
    %v133 = vunpack.c.l.b16 %v94
    %v134 = vunpack.c.l.b16 %v95
    %v135 = vunpack.c.l.b16 %v96
    %v136 = vunpack.c.l.b16 %v97
    %v137 = vunpack.c.l.b16 %v98
    %v138 = vunpack.c.l.b16 %v99
    %v139 = vunpack.c.l.b16 %v100
    %v140 = vunpack.c.l.b16 %v101
    %v141 = vunpack.c.l.b16 %v102
    %v142 = vunpack.c.l.b16 %v103
    %v143 = vunpack.c.l.b16 %v104
    %v144 = vunpack.c.l.b16 %v105
    %v145 = vunpack.c.l.b16 %v106
    %v146 = vunpack.c.l.b16 %v107
    %v147 = vunpack.c.l.b16 %v108
    %v148 = vpack.c.b16 %v133, %v132
    %v149 = vpack.c.b16 %v135, %v134
    %v150 = vpack.c.b16 %v137, %v136
    %v151 = vpack.c.b16 %v139, %v138
    %v152 = vpack.c.b16 %v141, %v140
    %v153 = vpack.c.b16 %v143, %v142
    %v154 = vpack.c.b16 %v145, %v144
    %v155 = vpack.c.b16 %v147, %v146
    %164 = vmatprep.subr.bf16.mxu0 0
    %165 = vmatpush1.bf16.msra.mxu0 %v148
    %166 = vmatprep.subr.bf16.mxu0 0
    %167 = vmatpush1.bf16.msra.mxu0 %v149
    %168 = vmatprep.subr.bf16.mxu0 0
    %169 = vmatpush1.bf16.msra.mxu0 %v150
    %170 = vmatprep.subr.bf16.mxu0 0
    %171 = vmatpush1.bf16.msra.mxu0 %v151
    %172 = vmatprep.subr.bf16.mxu0 0
    %173 = vmatpush1.bf16.msra.mxu0 %v152
    %174 = vmatprep.subr.bf16.mxu0 0
    %175 = vmatpush1.bf16.msra.mxu0 %v153
    %176 = vmatprep.subr.bf16.mxu0 0
    %177 = vmatpush1.bf16.msra.mxu0 %v154
    %178 = vmatprep.subr.bf16.mxu0 0
    %179 = vmatpush1.bf16.msra.mxu0 %v155
    %180 = vmatprep.subr.bf16.mxu0 0
    %181 = vmatpush1.bf16.msra.mxu0 0
    %182 = vmatprep.subr.bf16.mxu0 0
    %183 = vmatpush1.bf16.msra.mxu0 0
    %184 = vmatprep.subr.bf16.mxu0 0
    %185 = vmatpush1.bf16.msra.mxu0 0
    %186 = vmatprep.subr.bf16.mxu0 0
    %187 = vmatpush1.bf16.msra.mxu0 0
    %188 = vmatprep.subr.bf16.mxu0 0
    %189 = vmatpush1.bf16.msra.mxu0 0
    %190 = vmatprep.subr.bf16.mxu0 0
    %191 = vmatpush1.bf16.msra.mxu0 0
    %192 = vmatprep.subr.bf16.mxu0 0
    %193 = vmatpush1.bf16.msra.mxu0 0
    %194 = vmatprep.subr.bf16.mxu0 0
    %195 = vmatpush1.bf16.msra.mxu0 0
    %196 = vmatprep.mubr.bf16.mxu0 0
    %197 = vmatmul.mubr.bf16.gmra.mrb[0].mxu0 %v92
    %v198 = vpop.f32.mrb[0].mxu0
    %v199 = vadd.f32 %v114, %v198
    %v200 = vpop.f32.mrb[0].mxu0
    %v201 = vpop.f32.mrb[0].mxu0
    %v202 = vpop.f32.mrb[0].mxu0
    %203 = vdwg.mxu0
    %204 = vst [vmem:[#allocation2] sm:$0xff] %v199
    %v205 = vld [vmem:[%s4] sm:$0xf]
    %v206 = vld [vmem:[%s4 + $0x4] sm:$0xf]
    %v207 = vld [vmem:[%s4 + $0x8] sm:$0xf]
    %v208 = vld [vmem:[%s4 + $0xc] sm:$0xf]
    %v209 = vld [vmem:[#allocation4] sm:$0xff]
    %v210 = vld [vmem:[#allocation5] sm:$0xff]
    %v211 = vld [vmem:[#allocation2] sm:$0xff]
    %v212 = vpack.c.bf16 %v209, %v209
    %v217 = vunpack.c.l.b16 %v205
    %v218 = vunpack.c.l.b16 %v206
    %v219 = vunpack.c.l.b16 %v207
    %v220 = vunpack.c.l.b16 %v208
    %v221 = vpack.c.b16 %v218, %v217
    %v222 = vpack.c.b16 %v220, %v219
    %vm225 = vcmask 261120
    %v227 = vsel %vm225, %v212, 0
    %229 = vmatprep.subr.bf16.mxu0 0
    %230 = vmatpush1.bf16.msra.mxu0 %v221
    %231 = vmatprep.subr.bf16.mxu0 0
    %232 = vmatpush1.bf16.msra.mxu0 %v222
    %233 = vmatprep.subr.bf16.mxu0 0
    %234 = vmatpush1.bf16.msra.mxu0 0
    %235 = vmatprep.subr.bf16.mxu0 0
    %236 = vmatpush1.bf16.msra.mxu0 0
    %237 = vmatprep.subr.bf16.mxu0 0
    %238 = vmatpush1.bf16.msra.mxu0 0
    %239 = vmatprep.subr.bf16.mxu0 0
    %240 = vmatpush1.bf16.msra.mxu0 0
    %241 = vmatprep.subr.bf16.mxu0 0
    %242 = vmatpush1.bf16.msra.mxu0 0
    %243 = vmatprep.subr.bf16.mxu0 0
    %244 = vmatpush1.bf16.msra.mxu0 0
    %245 = vmatprep.subr.bf16.mxu0 0
    %246 = vmatpush1.bf16.msra.mxu0 0
    %247 = vmatprep.subr.bf16.mxu0 0
    %248 = vmatpush1.bf16.msra.mxu0 0
    %249 = vmatprep.subr.bf16.mxu0 0
    %250 = vmatpush1.bf16.msra.mxu0 0
    %251 = vmatprep.subr.bf16.mxu0 0
    %252 = vmatpush1.bf16.msra.mxu0 0
    %253 = vmatprep.subr.bf16.mxu0 0
    %254 = vmatpush1.bf16.msra.mxu0 0
    %255 = vmatprep.subr.bf16.mxu0 0
    %256 = vmatpush1.bf16.msra.mxu0 0
    %257 = vmatprep.subr.bf16.mxu0 0
    %258 = vmatpush1.bf16.msra.mxu0 0
    %259 = vmatprep.subr.bf16.mxu0 0
    %260 = vmatpush1.bf16.msra.mxu0 0
    %261 = vmatprep.mubr.bf16.mxu0 0
    %262 = vmatmul.mubr.bf16.gmra.mrb[0].mxu0 %v227
    %v263 = vpop.f32.mrb[0].mxu0
    %v264 = vadd.f32 0.0, %v263
    %v265 = vpop.f32.mrb[0].mxu0
    %v266 = vpop.f32.mrb[0].mxu0
    %v267 = vpop.f32.mrb[0].mxu0
    %268 = vdwg.mxu0
    %v269 = vadd.f32 %v211, %v264
    %v270 = vxor.u32 %v269, 2147483648
    %v271 = vmul.f32 %v270, 1.442695
    %v272 = vpow.pop %v271
    %v273 = vadd.f32 %v272, 1.0
    %v274 = vrcp.pop %v273
    %v275 = vmul.f32 1.0, %v274
    %v276 = vtanh.pop %v269
    %278 = vrot.lane.b32.xlu0 %v210, 32
    %v279 = vpop.permute.xlu0 %278
    %v281 = vmul.f32 %v275, %v279
    %283 = vrot.lane.b32.xlu0 %v276, 64
    %v284 = vpop.permute.xlu0 %283
    %v286 = vmul.f32 %v275, %v284
    %288 = vrot.lane.b32.xlu0 %v286, 32
    %v289 = vpop.permute.xlu0 %288
    %v291 = vadd.f32 %v281, %v289
    %v292 = vtanh.pop %v291
    %294 = vrot.lane.b32.xlu0 %v292, 64
    %v295 = vpop.permute.xlu0 %294
    %v297 = vmul.f32 %v275, %v295
    %299 = vrot.lane.b32.xlu0 %v297, 32
    %v300 = vpop.permute.xlu0 %299
    %302 = vst.msk [vmem:[#allocation3] sm:$0xff] %vm225, %v300
    %303 = vst.msk [vmem:[#allocation4] sm:$0xff] %vm225, %v300
    %305 = vrot.lane.b32.xlu0 %v291, 96
    %v306 = vpop.permute.xlu0 %305
    %308 = vst.msk [vmem:[#allocation5] sm:$0xff] %vm225, %v306
    %v309 = vld [vmem:[#allocation3] sm:$0xff]
    %v310 = vpack.c.bf16 %v309, %v309
    %v311 = vld [vmem:[#allocation11] sm:$0xf]
    %v312 = vld [vmem:[#allocation11 + $0x4] sm:$0xf]
    %v313 = vld [vmem:[#allocation11 + $0x8] sm:$0xf]
    %v314 = vld [vmem:[#allocation11 + $0xc] sm:$0xf]
    %v315 = vld [vmem:[%s7] sm:$0x1]
    %v317 = vlaneseq
    %v318 = vshrl.u32 %v317, 7
    %v319 = vsub.s32 0, %v318
    %v320 = vrot.slane %v315, %v319
    %v326 = vunpack.c.l.b16 %v311
    %v327 = vunpack.c.l.b16 %v312
    %v328 = vunpack.c.l.b16 %v313
    %v329 = vunpack.c.l.b16 %v314
    %v330 = vpack.c.b16 %v327, %v326
    %v331 = vpack.c.b16 %v329, %v328
    %v335 = vsel %vm225, %v310, 0
    %337 = vmatprep.subr.bf16.mxu0 0
    %338 = vmatpush1.bf16.msra.mxu0 %v330
    %339 = vmatprep.subr.bf16.mxu0 0
    %340 = vmatpush1.bf16.msra.mxu0 %v331
    %341 = vmatprep.subr.bf16.mxu0 0
    %342 = vmatpush1.bf16.msra.mxu0 0
    %343 = vmatprep.subr.bf16.mxu0 0
    %344 = vmatpush1.bf16.msra.mxu0 0
    %345 = vmatprep.subr.bf16.mxu0 0
    %346 = vmatpush1.bf16.msra.mxu0 0
    %347 = vmatprep.subr.bf16.mxu0 0
    %348 = vmatpush1.bf16.msra.mxu0 0
    %349 = vmatprep.subr.bf16.mxu0 0
    %350 = vmatpush1.bf16.msra.mxu0 0
    %351 = vmatprep.subr.bf16.mxu0 0
    %352 = vmatpush1.bf16.msra.mxu0 0
    %353 = vmatprep.subr.bf16.mxu0 0
    %354 = vmatpush1.bf16.msra.mxu0 0
    %355 = vmatprep.subr.bf16.mxu0 0
    %356 = vmatpush1.bf16.msra.mxu0 0
    %357 = vmatprep.subr.bf16.mxu0 0
    %358 = vmatpush1.bf16.msra.mxu0 0
    %359 = vmatprep.subr.bf16.mxu0 0
    %360 = vmatpush1.bf16.msra.mxu0 0
    %361 = vmatprep.subr.bf16.mxu0 0
    %362 = vmatpush1.bf16.msra.mxu0 0
    %363 = vmatprep.subr.bf16.mxu0 0
    %364 = vmatpush1.bf16.msra.mxu0 0
    %365 = vmatprep.subr.bf16.mxu0 0
    %366 = vmatpush1.bf16.msra.mxu0 0
    %367 = vmatprep.subr.bf16.mxu0 0
    %368 = vmatpush1.bf16.msra.mxu0 0
    %369 = vmatprep.mubr.bf16.mxu0 0
    %370 = vmatmul.mubr.bf16.gmra.mrb[0].mxu0 %v335
    %v371 = vpop.f32.mrb[0].mxu0
    %v372 = vadd.f32 %v320, %v371
    %v373 = vpop.f32.mrb[0].mxu0
    %v374 = vpop.f32.mrb[0].mxu0
    %v375 = vpop.f32.mrb[0].mxu0
    %376 = vdwg.mxu0
    %377 = vmax.xlane.f32.xlu0 %v372
    %v378 = vpop.xlane.xlu0 %377
    %v379 = vsub.f32 %v372, %v378
    %v380 = vmul.f32 %v379, 1.442695
    %v381 = vpow.pop %v380
    %382 = vadd.xlane.f32.xlu0 %v381
    %v383 = vpop.xlane.xlu0 %382
    %v384 = vlog2.pop %v383
    %v385 = vmul.f32 %v384, 0.6931472
    %v386 = vsub.f32 %v379, %v385
    %387 = vst [vmem:[#allocation12] sm:$0xff] %v386
    // Predicated region
    $region50: #{tpu_custom_call.1} parent=1 // pred_check
      %p388 = pneg %p74
    $region51: #{tpu_custom_call.1} parent=1 // pred_check_branch
      %390 = sbr.rel (%p388) target = $region53
    $region52: #{tpu_custom_call.1} parent=1 // pred_region
      %v391 = vld [vmem:[#allocation4] sm:$0xff]
      %392 = vst.msk [vmem:[#allocation13] sm:$0xff] %vm225, %v391
      %v393 = vld [vmem:[#allocation5] sm:$0xff]
      %394 = vst.msk [vmem:[#allocation15] sm:$0xff] %vm225, %v393
    $region53: #{tpu_custom_call.1} parent=1 // pred_fallthru
      _
    // Predicated region
    $region54: #{tpu_custom_call.1} parent=1 // pred_check
      _
    $region55: #{tpu_custom_call.1} parent=1 // pred_check_branch
      %396 = sbr.rel (0) target = $region57
    $region56: #{tpu_custom_call.1} parent=1 // pred_region
      %s398 = ssub.s32 128, 128
      %399 = vsyncadd [#allocation8], %s398
      %s401 = sshll.u32 [#allocation12], 4
      %s402 = int_to_ptr.vmem [resolvable:$true] %s401
      %404 = dma.vmem_to_hbm [thread:$0]  %s402, 128, %s8, [#allocation8]
    $region57: #{tpu_custom_call.1} parent=1 // pred_fallthru
      _
    // Predicated region
    $region58: #{tpu_custom_call.1} parent=1 // pred_check
      _
    $region59: #{tpu_custom_call.1} parent=1 // pred_check_branch
      %406 = sbr.rel (0) target = $region61
    $region60: #{tpu_custom_call.1} parent=1 // pred_region
      %s408 = ssub.s32 128, 128
      %409 = vsyncadd [#allocation14], %s408
      %s411 = sshll.u32 [#allocation13], 4
      %s412 = int_to_ptr.vmem [resolvable:$true] %s411
      %414 = dma.vmem_to_hbm [thread:$0]  %s412, 128, %s9, [#allocation14]
    $region61: #{tpu_custom_call.1} parent=1 // pred_fallthru
      _
    // Predicated region
    $region62: #{tpu_custom_call.1} parent=1 // pred_check
      _
    $region63: #{tpu_custom_call.1} parent=1 // pred_check_branch
      %416 = sbr.rel (0) target = $region65
    $region64: #{tpu_custom_call.1} parent=1 // pred_region
      %s418 = ssub.s32 128, 128
      %419 = vsyncadd [#allocation14], %s418
      %s421 = sshll.u32 [#allocation15], 4
      %s422 = int_to_ptr.vmem [resolvable:$true] %s421
      %424 = dma.vmem_to_hbm [thread:$0]  %s422, 128, %s10, [#allocation14]
    $region65: #{tpu_custom_call.1} parent=1 // pred_fallthru
      _
    // Predicated region
    $region66: #{tpu_custom_call.1} parent=1 // pred_check
      _
    $region67: #{tpu_custom_call.1} parent=1 // pred_check_branch
      %426 = sbr.rel (0) target = $region69
    $region68: #{tpu_custom_call.1} parent=1 // pred_region
      %427 = dma.done [#allocation8], 128
    $region69: #{tpu_custom_call.1} parent=1 // pred_fallthru
      _
    // Predicated region
    $region70: #{tpu_custom_call.1} parent=1 // pred_check
      _
    $region71: #{tpu_custom_call.1} parent=1 // pred_check_branch
      %429 = sbr.rel (0) target = $region73
    $region72: #{tpu_custom_call.1} parent=1 // pred_region
      %430 = dma.done [#allocation14], 128
    $region73: #{tpu_custom_call.1} parent=1 // pred_fallthru
      _
    // Predicated region
    $region74: #{tpu_custom_call.1} parent=1 // pred_check
      _
    $region75: #{tpu_custom_call.1} parent=1 // pred_check_branch
      %432 = sbr.rel (0) target = $region77
    $region76: #{tpu_custom_call.1} parent=1 // pred_region
      %433 = dma.done [#allocation14], 128
    $region77: #{tpu_custom_call.1} parent=1 // pred_fallthru
      _
    %434 = vsyncpa [#allocation7], 1
    %435 = vsyncpa [#allocation10], 1
    %436 = vsyncpa [#allocation8], 1
    %437 = vsyncpa [#allocation14], 1

</llo_original>
